<compile_context>
chip_gen: v7x
topology: tpu7x:2x2x1
jax: 0.10.0
libtpu: 0.0.40
codegen_flags: <defaults>
</compile_context>

<pallas_src>
import math

import jax
import jax.numpy as jnp
from jax.experimental import pallas as pl
from jax.experimental.pallas import tpu as pltpu


def _round_up(x, m):
    return ((x + m - 1) // m) * m


# ----------------------------------------------------------------------------
# Pallas kernel: fully fused forward (embedding gather + recurrence + Linear).
# ----------------------------------------------------------------------------
def _make_lstm_kernel(seq_len, hidden, r_whh, r_lin, r_bl):
    """Builds the fused kernel.

    Packed weight ref layout (rows x 4H lanes, every segment 8-row aligned):
        [0      : vocab)       emb_proj = embedding @ W_ih^T + b_ih + b_hh
        [r_whh  : r_whh + H)   W_hh^T
        [r_lin  : r_lin + H)   W_lin^T zero-padded to 4H lanes (cols 0..1 live)
        [r_bl   : r_bl  + 1)   b_lin   zero-padded to 4H lanes (cols 0..1 live)
    """
    H = hidden

    def kernel(tok_ref, w_ref, out_ref):
        # Recurrent weights: cast once to bf16 so the serial h @ W_hh matmul
        # is a single MXU pass per step (biggest win on v5e's bf16-only MXU).
        whh = w_ref[r_whh:r_whh + H, :].astype(jnp.bfloat16)          # (H, 4H)

        # LstmModule.forward defaults hx to zeros.
        # TODO(synk): no path for a caller-provided hx (LSTM.forward always
        #             starts from state=None for layer 0).
        h = jnp.zeros((1, H), jnp.float32)
        c = jnp.zeros((1, H), jnp.float32)

        # T is small and static -> unrolled Python loop is fine.
        # TODO(synk): for large T switch to lax.fori_loop(..., unroll=4..8)
        #             with the gathered rows staged through a VMEM scratch,
        #             and on v7x chunk the projection to respect 64 MiB VMEM.
        for t in range(seq_len):
            tok = tok_ref[t]                                  # SMEM scalar read
            # In-kernel embedding gather: the row already holds
            # x @ W_ih^T + b_ih + b_hh (fused at param-build time).
            xw = w_ref[pl.ds(tok, 1), :]                              # (1, 4H)
            w = xw + jnp.dot(h.astype(jnp.bfloat16), whh,
                             preferred_element_type=jnp.float32)      # (1, 4H)
            # Gate order [i, f, o, g] (LstmModule slicing, NOT nn.LSTM order).
            # sigmoid via tanh identity keeps all nonlinearities on the EUP.
            sig = 0.5 * jnp.tanh(0.5 * w[:, :3 * H]) + 0.5
            g = jnp.tanh(w[:, 3 * H:])
            i = sig[:, 0 * H:1 * H]
            f = sig[:, 1 * H:2 * H]
            o = sig[:, 2 * H:3 * H]
            c = f * c + i * g
            h = o * jnp.tanh(c)

        # Fused final Linear(H, 2): W_lin^T is zero-padded to 4H lanes so the
        # output store is a lane-dense (1, 128) vst; logits live in lanes 0..1.
        out_ref[...] = (jnp.dot(h, w_ref[r_lin:r_lin + H, :],
                                preferred_element_type=jnp.float32)
                        + w_ref[r_bl:r_bl + 1, :])

    return kernel


def lstm_forward(tokens, packed, layout):
    """tokens: (T,) int32 ids.  packed: pre-fused weight slab.
    Returns (1, 4H) f32 with the two logits in lanes 0..1."""
    seq_len = tokens.shape[0]
    H = layout["hidden"]
    four_h = 4 * H
    kernel = _make_lstm_kernel(seq_len, H, layout["r_whh"],
                               layout["r_lin"], layout["r_bl"])
    grid_spec = pltpu.PrefetchScalarGridSpec(
        num_scalar_prefetch=1,                       # tokens -> SMEM
        grid=(1,),
        in_specs=[pl.BlockSpec(packed.shape, lambda i, tok: (0, 0))],
        out_specs=pl.BlockSpec((1, four_h), lambda i, tok: (0, 0)),
    )
    return pl.pallas_call(
        kernel,
        out_shape=jax.ShapeDtypeStruct((1, four_h), jnp.float32),
        grid_spec=grid_spec,
        compiler_params=pltpu.CompilerParams(
            dimension_semantics=("arbitrary",)),
    )(tokens, packed)


# ----------------------------------------------------------------------------
# Parameter construction (deterministic, mirrors the PyTorch shapes) + the
# pre-fused / pre-packed weight slab the kernel consumes.
# ----------------------------------------------------------------------------
def make_params(key, vocab_size, input_units, hidden_units):
    k_emb, k_ih, k_hh, k_bih, k_bhh, k_wl, k_bl = jax.random.split(key, 7)
    stdv = 1.0 / math.sqrt(hidden_units)
    four_h = 4 * hidden_units

    # nn.Embedding default init: N(0, 1)
    embedding = jax.random.normal(k_emb, (vocab_size, input_units),
                                  jnp.float32)
    # LstmModule.reset_parameters: uniform(-stdv, stdv)
    w_ih = jax.random.uniform(k_ih, (four_h, input_units), jnp.float32,
                              -stdv, stdv)
    w_hh = jax.random.uniform(k_hh, (four_h, hidden_units), jnp.float32,
                              -stdv, stdv)
    b_ih = jax.random.uniform(k_bih, (four_h,), jnp.float32, -stdv, stdv)
    b_hh = jax.random.uniform(k_bhh, (four_h,), jnp.float32, -stdv, stdv)
    # nn.Linear(hidden_units, 2)
    bound = 1.0 / math.sqrt(hidden_units)
    w_lin = jax.random.uniform(k_wl, (2, hidden_units), jnp.float32,
                               -bound, bound)
    b_lin = jax.random.uniform(k_bl, (2,), jnp.float32, -bound, bound)

    # ---- pre-fused / pre-packed weights (done ONCE, off the launch path) ----
    # emb_proj[v] = embedding[v] @ W_ih^T + b_ih + b_hh   -> (vocab, 4H)
    emb_proj = (jnp.dot(embedding, w_ih.T,
                        precision=jax.lax.Precision.HIGHEST)
                + (b_ih + b_hh)[None, :])

    vocab_pad = _round_up(vocab_size, 8)
    r_whh = vocab_pad
    r_lin = r_whh + hidden_units
    r_bl = r_lin + hidden_units
    n_rows = _round_up(r_bl + 1, 8)

    packed = jnp.zeros((n_rows, four_h), jnp.float32)
    packed = packed.at[:vocab_size, :].set(emb_proj)
    packed = packed.at[r_whh:r_whh + hidden_units, :].set(w_hh.T)
    packed = packed.at[r_lin:r_lin + hidden_units, :2].set(w_lin.T)
    packed = packed.at[r_bl, :2].set(b_lin)

    params = dict(embedding=embedding, w_ih=w_ih, w_hh=w_hh, b_ih=b_ih,
                  b_hh=b_hh, w_lin=w_lin, b_lin=b_lin, packed=packed)
    layout = dict(hidden=hidden_units, r_whh=r_whh, r_lin=r_lin, r_bl=r_bl)
    return params, layout


def lstm_model(tokens, params, layout):
    """tokens: (T,) int32 token ids.  Returns (1, 2) float32 logits."""
    out = lstm_forward(tokens.astype(jnp.int32), params["packed"], layout)
    # softmax_out = Linear(h_last); torch.stack([.], 0) -> (1, 2)
    return out[:, :2]


# ----------------------------------------------------------------------------
# Pure-JAX reference (f32 throughout) for correctness.
# ----------------------------------------------------------------------------
def lstm_model_ref(tokens, params):
    hidden = params["w_hh"].shape[1]
    h = jnp.zeros((hidden,), jnp.float32)
    c = jnp.zeros((hidden,), jnp.float32)
    for t in range(tokens.shape[0]):
        x = params["embedding"][tokens[t]]
        w = (params["w_ih"] @ x + params["b_ih"]
             + params["w_hh"] @ h + params["b_hh"])
        i = jax.nn.sigmoid(w[0 * hidden:1 * hidden])
        f = jax.nn.sigmoid(w[1 * hidden:2 * hidden])
        o = jax.nn.sigmoid(w[2 * hidden:3 * hidden])
        g = jnp.tanh(w[3 * hidden:4 * hidden])
        c = f * c + i * g
        h = o * jnp.tanh(c)
    out = params["w_lin"] @ h + params["b_lin"]
    return out[None, :]


if __name__ == "__main__":
    vocab_size, input_units, hidden_units, seq_len = 20, 32, 32, 8

    key = jax.random.PRNGKey(0)
    k_params, k_tok = jax.random.split(key)
    params, layout = make_params(k_params, vocab_size, input_units,
                                 hidden_units)
    tokens = jax.random.randint(k_tok, (seq_len,), 0, vocab_size,
                                dtype=jnp.int32)

    out = jax.block_until_ready(lstm_model(tokens, params, layout))
    ref = jax.block_until_ready(lstm_model_ref(tokens, params))

    assert out.shape == (1, 2) and out.dtype == jnp.float32
    # Tolerance loosened vs. the f32 reference because the serial recurrent
    # matmul intentionally runs with bf16 operands (single MXU pass/step).
    assert jnp.allclose(out, ref, atol=2e-2, rtol=2e-2), (out, ref)
    print("KERNEL_OK")
</pallas_src>

<mosaic_0001>
module attributes {stable_mosaic.version = 11 : i64} {
  func.func @kernel(%arg0: i32, %arg1: memref<8xi32, #tpu.memory_space<smem>>, %arg2: memref<96x128xf32, #tpu.memory_space<vmem>>, %arg3: memref<1x128xf32, #tpu.memory_space<vmem>>) attributes {dimension_semantics = [#tpu.dimension_semantics<arbitrary>], iteration_bounds = array<i64: 1>, scalar_prefetch = 1 : i64, scratch_operands = 0 : i64, tpu.core_type = #tpu.core_type<tc>, window_params = [{pipeline_mode = #tpu.pipeline_mode<synchronous>, transform_indices = @transform_0, window_bounds = array<i64: 96, 128>}, {pipeline_mode = #tpu.pipeline_mode<synchronous>, transform_indices = @transform_1, window_bounds = array<i64: 1, 128>}]} {
    %c24 = arith.constant 24 : index
    %c0 = arith.constant 0 : index
    %0 = vector.load %arg2[%c24, %c0] : memref<96x128xf32, #tpu.memory_space<vmem>>, vector<32x128xf32>
    %1 = arith.truncf %0 : vector<32x128xf32> to vector<32x128xbf16>
    %cst = arith.constant 0.000000e+00 : f32
    %2 = vector.broadcast %cst : f32 to vector<1x32xf32>
    %cst_0 = arith.constant 0.000000e+00 : f32
    %3 = vector.broadcast %cst_0 : f32 to vector<1x32xf32>
    %c0_1 = arith.constant 0 : index
    %4 = memref.load %arg1[%c0_1] : memref<8xi32, #tpu.memory_space<smem>>
    %5 = arith.index_cast %4 : i32 to index
    %c0_2 = arith.constant 0 : index
    %6 = vector.load %arg2[%5, %c0_2] : memref<96x128xf32, #tpu.memory_space<vmem>>, vector<1x128xf32>
    %7 = arith.truncf %2 : vector<1x32xf32> to vector<1x32xbf16>
    %cst_3 = arith.constant dense<0.000000e+00> : vector<1x128xf32>
    %8 = tpu.matmul %7, %1, %cst_3 {dimension_numbers = #tpu.dot_dimension_numbers<[1], [0], [0], [1], [0, 0, 1, 1], [], []>} : vector<1x32xbf16>, vector<32x128xbf16>, vector<1x128xf32> -> vector<1x128xf32>
    %9 = arith.addf %6, %8 : vector<1x128xf32>
    %10 = vector.extract_strided_slice %9 {offsets = [0, 0], sizes = [1, 96], strides = [1, 1]} : vector<1x128xf32> to vector<1x96xf32>
    %cst_4 = arith.constant 5.000000e-01 : f32
    %11 = vector.broadcast %cst_4 : f32 to vector<1x96xf32>
    %12 = arith.mulf %11, %10 : vector<1x96xf32>
    %13 = math.tanh %12 : vector<1x96xf32>
    %cst_5 = arith.constant 5.000000e-01 : f32
    %14 = vector.broadcast %cst_5 : f32 to vector<1x96xf32>
    %15 = arith.mulf %14, %13 : vector<1x96xf32>
    %cst_6 = arith.constant 5.000000e-01 : f32
    %16 = vector.broadcast %cst_6 : f32 to vector<1x96xf32>
    %17 = arith.addf %15, %16 : vector<1x96xf32>
    %18 = vector.extract_strided_slice %9 {offsets = [0, 96], sizes = [1, 32], strides = [1, 1]} : vector<1x128xf32> to vector<1x32xf32>
    %19 = math.tanh %18 : vector<1x32xf32>
    %20 = vector.extract_strided_slice %17 {offsets = [0, 0], sizes = [1, 32], strides = [1, 1]} : vector<1x96xf32> to vector<1x32xf32>
    %21 = vector.extract_strided_slice %17 {offsets = [0, 32], sizes = [1, 32], strides = [1, 1]} : vector<1x96xf32> to vector<1x32xf32>
    %22 = vector.extract_strided_slice %17 {offsets = [0, 64], sizes = [1, 32], strides = [1, 1]} : vector<1x96xf32> to vector<1x32xf32>
    %23 = arith.mulf %21, %3 : vector<1x32xf32>
    %24 = arith.mulf %20, %19 : vector<1x32xf32>
    %25 = arith.addf %23, %24 : vector<1x32xf32>
    %26 = math.tanh %25 : vector<1x32xf32>
    %27 = arith.mulf %22, %26 : vector<1x32xf32>
    %c1 = arith.constant 1 : index
    %28 = memref.load %arg1[%c1] : memref<8xi32, #tpu.memory_space<smem>>
    %29 = arith.index_cast %28 : i32 to index
    %c0_7 = arith.constant 0 : index
    %30 = vector.load %arg2[%29, %c0_7] : memref<96x128xf32, #tpu.memory_space<vmem>>, vector<1x128xf32>
    %31 = arith.truncf %27 : vector<1x32xf32> to vector<1x32xbf16>
    %cst_8 = arith.constant dense<0.000000e+00> : vector<1x128xf32>
    %32 = tpu.matmul %31, %1, %cst_8 {dimension_numbers = #tpu.dot_dimension_numbers<[1], [0], [0], [1], [0, 0, 1, 1], [], []>} : vector<1x32xbf16>, vector<32x128xbf16>, vector<1x128xf32> -> vector<1x128xf32>
    %33 = arith.addf %30, %32 : vector<1x128xf32>
    %34 = vector.extract_strided_slice %33 {offsets = [0, 0], sizes = [1, 96], strides = [1, 1]} : vector<1x128xf32> to vector<1x96xf32>
    %cst_9 = arith.constant 5.000000e-01 : f32
    %35 = vector.broadcast %cst_9 : f32 to vector<1x96xf32>
    %36 = arith.mulf %35, %34 : vector<1x96xf32>
    %37 = math.tanh %36 : vector<1x96xf32>
    %cst_10 = arith.constant 5.000000e-01 : f32
    %38 = vector.broadcast %cst_10 : f32 to vector<1x96xf32>
    %39 = arith.mulf %38, %37 : vector<1x96xf32>
    %cst_11 = arith.constant 5.000000e-01 : f32
    %40 = vector.broadcast %cst_11 : f32 to vector<1x96xf32>
    %41 = arith.addf %39, %40 : vector<1x96xf32>
    %42 = vector.extract_strided_slice %33 {offsets = [0, 96], sizes = [1, 32], strides = [1, 1]} : vector<1x128xf32> to vector<1x32xf32>
    %43 = math.tanh %42 : vector<1x32xf32>
    %44 = vector.extract_strided_slice %41 {offsets = [0, 0], sizes = [1, 32], strides = [1, 1]} : vector<1x96xf32> to vector<1x32xf32>
    %45 = vector.extract_strided_slice %41 {offsets = [0, 32], sizes = [1, 32], strides = [1, 1]} : vector<1x96xf32> to vector<1x32xf32>
    %46 = vector.extract_strided_slice %41 {offsets = [0, 64], sizes = [1, 32], strides = [1, 1]} : vector<1x96xf32> to vector<1x32xf32>
    %47 = arith.mulf %45, %25 : vector<1x32xf32>
    %48 = arith.mulf %44, %43 : vector<1x32xf32>
    %49 = arith.addf %47, %48 : vector<1x32xf32>
    %50 = math.tanh %49 : vector<1x32xf32>
    %51 = arith.mulf %46, %50 : vector<1x32xf32>
    %c2 = arith.constant 2 : index
    %52 = memref.load %arg1[%c2] : memref<8xi32, #tpu.memory_space<smem>>
    %53 = arith.index_cast %52 : i32 to index
    %c0_12 = arith.constant 0 : index
    %54 = vector.load %arg2[%53, %c0_12] : memref<96x128xf32, #tpu.memory_space<vmem>>, vector<1x128xf32>
    %55 = arith.truncf %51 : vector<1x32xf32> to vector<1x32xbf16>
    %cst_13 = arith.constant dense<0.000000e+00> : vector<1x128xf32>
    %56 = tpu.matmul %55, %1, %cst_13 {dimension_numbers = #tpu.dot_dimension_numbers<[1], [0], [0], [1], [0, 0, 1, 1], [], []>} : vector<1x32xbf16>, vector<32x128xbf16>, vector<1x128xf32> -> vector<1x128xf32>
    %57 = arith.addf %54, %56 : vector<1x128xf32>
    %58 = vector.extract_strided_slice %57 {offsets = [0, 0], sizes = [1, 96], strides = [1, 1]} : vector<1x128xf32> to vector<1x96xf32>
    %cst_14 = arith.constant 5.000000e-01 : f32
    %59 = vector.broadcast %cst_14 : f32 to vector<1x96xf32>
    %60 = arith.mulf %59, %58 : vector<1x96xf32>
    %61 = math.tanh %60 : vector<1x96xf32>
    %cst_15 = arith.constant 5.000000e-01 : f32
    %62 = vector.broadcast %cst_15 : f32 to vector<1x96xf32>
    %63 = arith.mulf %62, %61 : vector<1x96xf32>
    %cst_16 = arith.constant 5.000000e-01 : f32
    %64 = vector.broadcast %cst_16 : f32 to vector<1x96xf32>
    %65 = arith.addf %63, %64 : vector<1x96xf32>
    %66 = vector.extract_strided_slice %57 {offsets = [0, 96], sizes = [1, 32], strides = [1, 1]} : vector<1x128xf32> to vector<1x32xf32>
    %67 = math.tanh %66 : vector<1x32xf32>
    %68 = vector.extract_strided_slice %65 {offsets = [0, 0], sizes = [1, 32], strides = [1, 1]} : vector<1x96xf32> to vector<1x32xf32>
    %69 = vector.extract_strided_slice %65 {offsets = [0, 32], sizes = [1, 32], strides = [1, 1]} : vector<1x96xf32> to vector<1x32xf32>
    %70 = vector.extract_strided_slice %65 {offsets = [0, 64], sizes = [1, 32], strides = [1, 1]} : vector<1x96xf32> to vector<1x32xf32>
    %71 = arith.mulf %69, %49 : vector<1x32xf32>
    %72 = arith.mulf %68, %67 : vector<1x32xf32>
    %73 = arith.addf %71, %72 : vector<1x32xf32>
    %74 = math.tanh %73 : vector<1x32xf32>
    %75 = arith.mulf %70, %74 : vector<1x32xf32>
    %c3 = arith.constant 3 : index
    %76 = memref.load %arg1[%c3] : memref<8xi32, #tpu.memory_space<smem>>
    %77 = arith.index_cast %76 : i32 to index
    %c0_17 = arith.constant 0 : index
    %78 = vector.load %arg2[%77, %c0_17] : memref<96x128xf32, #tpu.memory_space<vmem>>, vector<1x128xf32>
    %79 = arith.truncf %75 : vector<1x32xf32> to vector<1x32xbf16>
    %cst_18 = arith.constant dense<0.000000e+00> : vector<1x128xf32>
    %80 = tpu.matmul %79, %1, %cst_18 {dimension_numbers = #tpu.dot_dimension_numbers<[1], [0], [0], [1], [0, 0, 1, 1], [], []>} : vector<1x32xbf16>, vector<32x128xbf16>, vector<1x128xf32> -> vector<1x128xf32>
    %81 = arith.addf %78, %80 : vector<1x128xf32>
    %82 = vector.extract_strided_slice %81 {offsets = [0, 0], sizes = [1, 96], strides = [1, 1]} : vector<1x128xf32> to vector<1x96xf32>
    %cst_19 = arith.constant 5.000000e-01 : f32
    %83 = vector.broadcast %cst_19 : f32 to vector<1x96xf32>
    %84 = arith.mulf %83, %82 : vector<1x96xf32>
    %85 = math.tanh %84 : vector<1x96xf32>
    %cst_20 = arith.constant 5.000000e-01 : f32
    %86 = vector.broadcast %cst_20 : f32 to vector<1x96xf32>
    %87 = arith.mulf %86, %85 : vector<1x96xf32>
    %cst_21 = arith.constant 5.000000e-01 : f32
    %88 = vector.broadcast %cst_21 : f32 to vector<1x96xf32>
    %89 = arith.addf %87, %88 : vector<1x96xf32>
    %90 = vector.extract_strided_slice %81 {offsets = [0, 96], sizes = [1, 32], strides = [1, 1]} : vector<1x128xf32> to vector<1x32xf32>
    %91 = math.tanh %90 : vector<1x32xf32>
    %92 = vector.extract_strided_slice %89 {offsets = [0, 0], sizes = [1, 32], strides = [1, 1]} : vector<1x96xf32> to vector<1x32xf32>
    %93 = vector.extract_strided_slice %89 {offsets = [0, 32], sizes = [1, 32], strides = [1, 1]} : vector<1x96xf32> to vector<1x32xf32>
    %94 = vector.extract_strided_slice %89 {offsets = [0, 64], sizes = [1, 32], strides = [1, 1]} : vector<1x96xf32> to vector<1x32xf32>
    %95 = arith.mulf %93, %73 : vector<1x32xf32>
    %96 = arith.mulf %92, %91 : vector<1x32xf32>
    %97 = arith.addf %95, %96 : vector<1x32xf32>
    %98 = math.tanh %97 : vector<1x32xf32>
    %99 = arith.mulf %94, %98 : vector<1x32xf32>
    %c4 = arith.constant 4 : index
    %100 = memref.load %arg1[%c4] : memref<8xi32, #tpu.memory_space<smem>>
    %101 = arith.index_cast %100 : i32 to index
    %c0_22 = arith.constant 0 : index
    %102 = vector.load %arg2[%101, %c0_22] : memref<96x128xf32, #tpu.memory_space<vmem>>, vector<1x128xf32>
    %103 = arith.truncf %99 : vector<1x32xf32> to vector<1x32xbf16>
    %cst_23 = arith.constant dense<0.000000e+00> : vector<1x128xf32>
    %104 = tpu.matmul %103, %1, %cst_23 {dimension_numbers = #tpu.dot_dimension_numbers<[1], [0], [0], [1], [0, 0, 1, 1], [], []>} : vector<1x32xbf16>, vector<32x128xbf16>, vector<1x128xf32> -> vector<1x128xf32>
    %105 = arith.addf %102, %104 : vector<1x128xf32>
    %106 = vector.extract_strided_slice %105 {offsets = [0, 0], sizes = [1, 96], strides = [1, 1]} : vector<1x128xf32> to vector<1x96xf32>
    %cst_24 = arith.constant 5.000000e-01 : f32
    %107 = vector.broadcast %cst_24 : f32 to vector<1x96xf32>
    %108 = arith.mulf %107, %106 : vector<1x96xf32>
    %109 = math.tanh %108 : vector<1x96xf32>
    %cst_25 = arith.constant 5.000000e-01 : f32
    %110 = vector.broadcast %cst_25 : f32 to vector<1x96xf32>
    %111 = arith.mulf %110, %109 : vector<1x96xf32>
    %cst_26 = arith.constant 5.000000e-01 : f32
    %112 = vector.broadcast %cst_26 : f32 to vector<1x96xf32>
    %113 = arith.addf %111, %112 : vector<1x96xf32>
    %114 = vector.extract_strided_slice %105 {offsets = [0, 96], sizes = [1, 32], strides = [1, 1]} : vector<1x128xf32> to vector<1x32xf32>
    %115 = math.tanh %114 : vector<1x32xf32>
    %116 = vector.extract_strided_slice %113 {offsets = [0, 0], sizes = [1, 32], strides = [1, 1]} : vector<1x96xf32> to vector<1x32xf32>
    %117 = vector.extract_strided_slice %113 {offsets = [0, 32], sizes = [1, 32], strides = [1, 1]} : vector<1x96xf32> to vector<1x32xf32>
    %118 = vector.extract_strided_slice %113 {offsets = [0, 64], sizes = [1, 32], strides = [1, 1]} : vector<1x96xf32> to vector<1x32xf32>
    %119 = arith.mulf %117, %97 : vector<1x32xf32>
    %120 = arith.mulf %116, %115 : vector<1x32xf32>
    %121 = arith.addf %119, %120 : vector<1x32xf32>
    %122 = math.tanh %121 : vector<1x32xf32>
    %123 = arith.mulf %118, %122 : vector<1x32xf32>
    %c5 = arith.constant 5 : index
    %124 = memref.load %arg1[%c5] : memref<8xi32, #tpu.memory_space<smem>>
    %125 = arith.index_cast %124 : i32 to index
    %c0_27 = arith.constant 0 : index
    %126 = vector.load %arg2[%125, %c0_27] : memref<96x128xf32, #tpu.memory_space<vmem>>, vector<1x128xf32>
    %127 = arith.truncf %123 : vector<1x32xf32> to vector<1x32xbf16>
    %cst_28 = arith.constant dense<0.000000e+00> : vector<1x128xf32>
    %128 = tpu.matmul %127, %1, %cst_28 {dimension_numbers = #tpu.dot_dimension_numbers<[1], [0], [0], [1], [0, 0, 1, 1], [], []>} : vector<1x32xbf16>, vector<32x128xbf16>, vector<1x128xf32> -> vector<1x128xf32>
    %129 = arith.addf %126, %128 : vector<1x128xf32>
    %130 = vector.extract_strided_slice %129 {offsets = [0, 0], sizes = [1, 96], strides = [1, 1]} : vector<1x128xf32> to vector<1x96xf32>
    %cst_29 = arith.constant 5.000000e-01 : f32
    %131 = vector.broadcast %cst_29 : f32 to vector<1x96xf32>
    %132 = arith.mulf %131, %130 : vector<1x96xf32>
    %133 = math.tanh %132 : vector<1x96xf32>
    %cst_30 = arith.constant 5.000000e-01 : f32
    %134 = vector.broadcast %cst_30 : f32 to vector<1x96xf32>
    %135 = arith.mulf %134, %133 : vector<1x96xf32>
    %cst_31 = arith.constant 5.000000e-01 : f32
    %136 = vector.broadcast %cst_31 : f32 to vector<1x96xf32>
    %137 = arith.addf %135, %136 : vector<1x96xf32>
    %138 = vector.extract_strided_slice %129 {offsets = [0, 96], sizes = [1, 32], strides = [1, 1]} : vector<1x128xf32> to vector<1x32xf32>
    %139 = math.tanh %138 : vector<1x32xf32>
    %140 = vector.extract_strided_slice %137 {offsets = [0, 0], sizes = [1, 32], strides = [1, 1]} : vector<1x96xf32> to vector<1x32xf32>
    %141 = vector.extract_strided_slice %137 {offsets = [0, 32], sizes = [1, 32], strides = [1, 1]} : vector<1x96xf32> to vector<1x32xf32>
    %142 = vector.extract_strided_slice %137 {offsets = [0, 64], sizes = [1, 32], strides = [1, 1]} : vector<1x96xf32> to vector<1x32xf32>
    %143 = arith.mulf %141, %121 : vector<1x32xf32>
    %144 = arith.mulf %140, %139 : vector<1x32xf32>
    %145 = arith.addf %143, %144 : vector<1x32xf32>
    %146 = math.tanh %145 : vector<1x32xf32>
    %147 = arith.mulf %142, %146 : vector<1x32xf32>
    %c6 = arith.constant 6 : index
    %148 = memref.load %arg1[%c6] : memref<8xi32, #tpu.memory_space<smem>>
    %149 = arith.index_cast %148 : i32 to index
    %c0_32 = arith.constant 0 : index
    %150 = vector.load %arg2[%149, %c0_32] : memref<96x128xf32, #tpu.memory_space<vmem>>, vector<1x128xf32>
    %151 = arith.truncf %147 : vector<1x32xf32> to vector<1x32xbf16>
    %cst_33 = arith.constant dense<0.000000e+00> : vector<1x128xf32>
    %152 = tpu.matmul %151, %1, %cst_33 {dimension_numbers = #tpu.dot_dimension_numbers<[1], [0], [0], [1], [0, 0, 1, 1], [], []>} : vector<1x32xbf16>, vector<32x128xbf16>, vector<1x128xf32> -> vector<1x128xf32>
    %153 = arith.addf %150, %152 : vector<1x128xf32>
    %154 = vector.extract_strided_slice %153 {offsets = [0, 0], sizes = [1, 96], strides = [1, 1]} : vector<1x128xf32> to vector<1x96xf32>
    %cst_34 = arith.constant 5.000000e-01 : f32
    %155 = vector.broadcast %cst_34 : f32 to vector<1x96xf32>
    %156 = arith.mulf %155, %154 : vector<1x96xf32>
    %157 = math.tanh %156 : vector<1x96xf32>
    %cst_35 = arith.constant 5.000000e-01 : f32
    %158 = vector.broadcast %cst_35 : f32 to vector<1x96xf32>
    %159 = arith.mulf %158, %157 : vector<1x96xf32>
    %cst_36 = arith.constant 5.000000e-01 : f32
    %160 = vector.broadcast %cst_36 : f32 to vector<1x96xf32>
    %161 = arith.addf %159, %160 : vector<1x96xf32>
    %162 = vector.extract_strided_slice %153 {offsets = [0, 96], sizes = [1, 32], strides = [1, 1]} : vector<1x128xf32> to vector<1x32xf32>
    %163 = math.tanh %162 : vector<1x32xf32>
    %164 = vector.extract_strided_slice %161 {offsets = [0, 0], sizes = [1, 32], strides = [1, 1]} : vector<1x96xf32> to vector<1x32xf32>
    %165 = vector.extract_strided_slice %161 {offsets = [0, 32], sizes = [1, 32], strides = [1, 1]} : vector<1x96xf32> to vector<1x32xf32>
    %166 = vector.extract_strided_slice %161 {offsets = [0, 64], sizes = [1, 32], strides = [1, 1]} : vector<1x96xf32> to vector<1x32xf32>
    %167 = arith.mulf %165, %145 : vector<1x32xf32>
    %168 = arith.mulf %164, %163 : vector<1x32xf32>
    %169 = arith.addf %167, %168 : vector<1x32xf32>
    %170 = math.tanh %169 : vector<1x32xf32>
    %171 = arith.mulf %166, %170 : vector<1x32xf32>
    %c7 = arith.constant 7 : index
    %172 = memref.load %arg1[%c7] : memref<8xi32, #tpu.memory_space<smem>>
    %173 = arith.index_cast %172 : i32 to index
    %c0_37 = arith.constant 0 : index
    %174 = vector.load %arg2[%173, %c0_37] : memref<96x128xf32, #tpu.memory_space<vmem>>, vector<1x128xf32>
    %175 = arith.truncf %171 : vector<1x32xf32> to vector<1x32xbf16>
    %cst_38 = arith.constant dense<0.000000e+00> : vector<1x128xf32>
    %176 = tpu.matmul %175, %1, %cst_38 {dimension_numbers = #tpu.dot_dimension_numbers<[1], [0], [0], [1], [0, 0, 1, 1], [], []>} : vector<1x32xbf16>, vector<32x128xbf16>, vector<1x128xf32> -> vector<1x128xf32>
    %177 = arith.addf %174, %176 : vector<1x128xf32>
    %178 = vector.extract_strided_slice %177 {offsets = [0, 0], sizes = [1, 96], strides = [1, 1]} : vector<1x128xf32> to vector<1x96xf32>
    %cst_39 = arith.constant 5.000000e-01 : f32
    %179 = vector.broadcast %cst_39 : f32 to vector<1x96xf32>
    %180 = arith.mulf %179, %178 : vector<1x96xf32>
    %181 = math.tanh %180 : vector<1x96xf32>
    %cst_40 = arith.constant 5.000000e-01 : f32
    %182 = vector.broadcast %cst_40 : f32 to vector<1x96xf32>
    %183 = arith.mulf %182, %181 : vector<1x96xf32>
    %cst_41 = arith.constant 5.000000e-01 : f32
    %184 = vector.broadcast %cst_41 : f32 to vector<1x96xf32>
    %185 = arith.addf %183, %184 : vector<1x96xf32>
    %186 = vector.extract_strided_slice %177 {offsets = [0, 96], sizes = [1, 32], strides = [1, 1]} : vector<1x128xf32> to vector<1x32xf32>
    %187 = math.tanh %186 : vector<1x32xf32>
    %188 = vector.extract_strided_slice %185 {offsets = [0, 0], sizes = [1, 32], strides = [1, 1]} : vector<1x96xf32> to vector<1x32xf32>
    %189 = vector.extract_strided_slice %185 {offsets = [0, 32], sizes = [1, 32], strides = [1, 1]} : vector<1x96xf32> to vector<1x32xf32>
    %190 = vector.extract_strided_slice %185 {offsets = [0, 64], sizes = [1, 32], strides = [1, 1]} : vector<1x96xf32> to vector<1x32xf32>
    %191 = arith.mulf %189, %169 : vector<1x32xf32>
    %192 = arith.mulf %188, %187 : vector<1x32xf32>
    %193 = arith.addf %191, %192 : vector<1x32xf32>
    %194 = math.tanh %193 : vector<1x32xf32>
    %195 = arith.mulf %190, %194 : vector<1x32xf32>
    %c56 = arith.constant 56 : index
    %c0_42 = arith.constant 0 : index
    %196 = vector.load %arg2[%c56, %c0_42] : memref<96x128xf32, #tpu.memory_space<vmem>>, vector<32x128xf32>
    %cst_43 = arith.constant dense<0.000000e+00> : vector<1x128xf32>
    %197 = tpu.matmul %195, %196, %cst_43 {dimension_numbers = #tpu.dot_dimension_numbers<[1], [0], [0], [1], [0, 0, 1, 1], [], []>} : vector<1x32xf32>, vector<32x128xf32>, vector<1x128xf32> -> vector<1x128xf32>
    %c88 = arith.constant 88 : index
    %c0_44 = arith.constant 0 : index
    %198 = vector.load %arg2[%c88, %c0_44] : memref<96x128xf32, #tpu.memory_space<vmem>>, vector<1x128xf32>
    %199 = arith.addf %197, %198 : vector<1x128xf32>
    %c0_45 = arith.constant 0 : index
    %c0_46 = arith.constant 0 : index
    %200 = vector.load %arg3[%c0_45, %c0_46] : memref<1x128xf32, #tpu.memory_space<vmem>>, vector<1x128xf32>
    tpu.vector_store %arg3[%c0_45, %c0_46], %199 {strides = array<i32>} : memref<1x128xf32, #tpu.memory_space<vmem>>, vector<1x128xf32>,
    return
  }
  func.func @transform_0(%arg0: i32, %arg1: memref<8xi32, #tpu.memory_space<smem>>) -> (i32, i32) {
    %c0_i32 = arith.constant 0 : i32
    %c0_i32_0 = arith.constant 0 : i32
    %c0_i32_1 = arith.constant 0 : i32
    return %c0_i32, %c0_i32_0 : i32, i32
  }
  func.func @transform_1(%arg0: i32, %arg1: memref<8xi32, #tpu.memory_space<smem>>) -> (i32, i32) {
    %c0_i32 = arith.constant 0 : i32
    %c0_i32_0 = arith.constant 0 : i32
    %c0_i32_1 = arith.constant 0 : i32
    return %c0_i32, %c0_i32_0 : i32, i32
  }
}

</mosaic_0001>

<llo_original>
// kernel: tpu_custom_call.1
$region0: #{tpu_custom_call.1}
  #allocation0 [shape = 'u32[]', space=smem, size = 0x4, offset = 0x4, fixed_abs, tag = 'smem constant byte address 0x4 - core index']
  #allocation1 [shape = 'u32[144,128]{1,0:T(1,128)}', space=vmem, size = 0x12000, scoped, tag = 'internal scratch']
  #allocation2 [shape = 's32[1]{0}', space=sflag, size = 0x4, scoped, tag = 'scoped memory for tpu_custom_call.1']
  #allocation3 [shape = 'u8[512]{0}', space=smem, size = 0x200, scoped, tag = 'prefetched SMEM operand 0']
  %s0 = inlined_call_operand.hbm [shape: s32[8], index: 0, kind: input, shape index: {}]
  %s1 = inlined_call_operand.hbm [shape: f32[96,128], index: 1, kind: input, shape index: {}]
  %s2 = inlined_call_operand.hbm [shape: f32[1,128], index: 2, kind: output, shape index: {}]
  %s3 = sld [smem:[#allocation0]]
  $region18: #{tpu_custom_call.1} parent=0
    _
  %s5 = ssub.s32 1, %s3
  %s6 = scalar_select 0, %s5, %s3
  %8 = dma.hbm_to_smem %s0, 16, [#allocation3], [#allocation2]
  %9 = dma.done [#allocation2], 16
  %10 = sfence
  $region1: #{tpu_custom_call.1} parent=0
    #allocation4 [shape = 'u8[49152]{0}', space=vmem, size = 0xc000, scoped, tag = 'input window, operand 1, single buffered']
    #allocation5 [shape = 's32[1]{0}', space=sflag, size = 0x4, scoped, tag = 'scoped memory for tpu_custom_call.1']
    #allocation6 [shape = 's32[1]{0}', space=sflag, size = 0x4, scoped, tag = 'scoped memory for tpu_custom_call.1']
    #allocation7 [shape = 'u8[512]{0}', space=vmem, size = 0x400, scoped, tag = 'output window, operand 0, single buffered']
    %11 = vsyncpa [#allocation5], 0
    %12 = vsyncpa [#allocation6], 0
    // Predicated region
    $region2: #{tpu_custom_call.1} parent=1 // pred_check
      _
    $region3: #{tpu_custom_call.1} parent=1 // pred_check_branch
      %14 = sbr.rel (0) target = $region5
    $region4: #{tpu_custom_call.1} parent=1 // pred_region
      %s16 = ssub.s32 1536, 1536
      %17 = vsyncadd [#allocation5], %s16
      %s18 = sshll.u32 [#allocation4], 4
      %s19 = int_to_ptr.vmem [resolvable:$true] %s18
      %24 = dma.hbm_to_vmem [thread:$0]  %s1, 1536, %s19, [#allocation5], 128, 128, 8
    $region5: #{tpu_custom_call.1} parent=1 // pred_fallthru
      _
    // Predicated region
    $region6: #{tpu_custom_call.1} parent=1 // pred_check
      _
    $region7: #{tpu_custom_call.1} parent=1 // pred_check_branch
      %26 = sbr.rel (0) target = $region9
    $region8: #{tpu_custom_call.1} parent=1 // pred_region
      %27 = dma.done [#allocation5], 1536
    $region9: #{tpu_custom_call.1} parent=1 // pred_fallthru
      _
    %v29 = vld [vmem:[#allocation4 + $0x18] sm:$0xff]
    %v30 = vld [vmem:[#allocation4 + $0x20] sm:$0xff]
    %v31 = vld [vmem:[#allocation4 + $0x28] sm:$0xff]
    %v32 = vld [vmem:[#allocation4 + $0x30] sm:$0xff]
    %v33 = vpack.c.bf16 %v30, %v29
    %v34 = vpack.c.bf16 %v32, %v31
    %s35 = sld [smem:[#allocation3]]
    %s36 = scalar_lea.vmem [#allocation4], %s35
    %v37 = vld [vmem:[%s36] sm:$0x1]
    %vm38 = vcmask 261120
    %v40 = vsel %vm38, 0, 0
    %42 = vmatprep.subr.bf16.mxu0 0
    %43 = vmatpush1.bf16.msra.mxu0 %v33
    %44 = vmatprep.subr.bf16.mxu0 0
    %45 = vmatpush1.bf16.msra.mxu0 %v34
    %46 = vmatprep.subr.bf16.mxu0 0
    %47 = vmatpush1.bf16.msra.mxu0 0
    %48 = vmatprep.subr.bf16.mxu0 0
    %49 = vmatpush1.bf16.msra.mxu0 0
    %50 = vmatprep.subr.bf16.mxu0 0
    %51 = vmatpush1.bf16.msra.mxu0 0
    %52 = vmatprep.subr.bf16.mxu0 0
    %53 = vmatpush1.bf16.msra.mxu0 0
    %54 = vmatprep.subr.bf16.mxu0 0
    %55 = vmatpush1.bf16.msra.mxu0 0
    %56 = vmatprep.subr.bf16.mxu0 0
    %57 = vmatpush1.bf16.msra.mxu0 0
    %58 = vmatprep.subr.bf16.mxu0 0
    %59 = vmatpush1.bf16.msra.mxu0 0
    %60 = vmatprep.subr.bf16.mxu0 0
    %61 = vmatpush1.bf16.msra.mxu0 0
    %62 = vmatprep.subr.bf16.mxu0 0
    %63 = vmatpush1.bf16.msra.mxu0 0
    %64 = vmatprep.subr.bf16.mxu0 0
    %65 = vmatpush1.bf16.msra.mxu0 0
    %66 = vmatprep.subr.bf16.mxu0 0
    %67 = vmatpush1.bf16.msra.mxu0 0
    %68 = vmatprep.subr.bf16.mxu0 0
    %69 = vmatpush1.bf16.msra.mxu0 0
    %70 = vmatprep.subr.bf16.mxu0 0
    %71 = vmatpush1.bf16.msra.mxu0 0
    %72 = vmatprep.subr.bf16.mxu0 0
    %73 = vmatpush1.bf16.msra.mxu0 0
    %74 = vmatprep.mubr.bf16.mxu0 0
    %75 = vmatmul.mubr.bf16.gmra.mrb[0].mxu0 %v40
    %v76 = vpop.f32.mrb[0].mxu0
    %v77 = vadd.f32 0.0, %v76
    %v78 = vpop.f32.mrb[0].mxu0
    %v79 = vpop.f32.mrb[0].mxu0
    %v80 = vpop.f32.mrb[0].mxu0
    %81 = vdwg.mxu0
    %v82 = vadd.f32 %v37, %v77
    %v83 = vmul.f32 %v82, 0.5
    %v84 = vtanh.pop %v83
    %v85 = vmul.f32 %v84, 0.5
    %v86 = vadd.f32 %v85, 0.5
    %v87 = vtanh.pop %v82
    %v88 = vmul.f32 %v86, 0.0
    %90 = vrot.lane.b32.xlu0 %v87, 32
    %v91 = vpop.permute.xlu0 %90
    %v93 = vmul.f32 %v86, %v91
    %95 = vrot.lane.b32.xlu0 %v93, 32
    %v96 = vpop.permute.xlu0 %95
    %v98 = vadd.f32 %v88, %v96
    %v99 = vtanh.pop %v98
    %101 = vrot.lane.b32.xlu0 %v99, 32
    %v102 = vpop.permute.xlu0 %101
    %v104 = vmul.f32 %v86, %v102
    %s105 = sld [smem:[#allocation3 + $0x1]]
    %s106 = scalar_lea.vmem [#allocation4], %s105
    %v107 = vld [vmem:[%s106] sm:$0x1]
    %v108 = vpack.c.bf16 %v104, %v104
    %110 = vrot.lane.b32.xlu0 %v108, 64
    %v111 = vpop.permute.xlu0 %110
    %v113 = vsel %vm38, %v111, 0
    %115 = vmatprep.subr.bf16.mxu0 0
    %116 = vmatpush1.bf16.msra.mxu0 %v33
    %117 = vmatprep.subr.bf16.mxu0 0
    %118 = vmatpush1.bf16.msra.mxu0 %v34
    %119 = vmatprep.subr.bf16.mxu0 0
    %120 = vmatpush1.bf16.msra.mxu0 0
    %121 = vmatprep.subr.bf16.mxu0 0
    %122 = vmatpush1.bf16.msra.mxu0 0
    %123 = vmatprep.subr.bf16.mxu0 0
    %124 = vmatpush1.bf16.msra.mxu0 0
    %125 = vmatprep.subr.bf16.mxu0 0
    %126 = vmatpush1.bf16.msra.mxu0 0
    %127 = vmatprep.subr.bf16.mxu0 0
    %128 = vmatpush1.bf16.msra.mxu0 0
    %129 = vmatprep.subr.bf16.mxu0 0
    %130 = vmatpush1.bf16.msra.mxu0 0
    %131 = vmatprep.subr.bf16.mxu0 0
    %132 = vmatpush1.bf16.msra.mxu0 0
    %133 = vmatprep.subr.bf16.mxu0 0
    %134 = vmatpush1.bf16.msra.mxu0 0
    %135 = vmatprep.subr.bf16.mxu0 0
    %136 = vmatpush1.bf16.msra.mxu0 0
    %137 = vmatprep.subr.bf16.mxu0 0
    %138 = vmatpush1.bf16.msra.mxu0 0
    %139 = vmatprep.subr.bf16.mxu0 0
    %140 = vmatpush1.bf16.msra.mxu0 0
    %141 = vmatprep.subr.bf16.mxu0 0
    %142 = vmatpush1.bf16.msra.mxu0 0
    %143 = vmatprep.subr.bf16.mxu0 0
    %144 = vmatpush1.bf16.msra.mxu0 0
    %145 = vmatprep.subr.bf16.mxu0 0
    %146 = vmatpush1.bf16.msra.mxu0 0
    %147 = vmatprep.mubr.bf16.mxu0 0
    %148 = vmatmul.mubr.bf16.gmra.mrb[0].mxu0 %v113
    %v149 = vpop.f32.mrb[0].mxu0
    %v150 = vadd.f32 0.0, %v149
    %v151 = vpop.f32.mrb[0].mxu0
    %v152 = vpop.f32.mrb[0].mxu0
    %v153 = vpop.f32.mrb[0].mxu0
    %154 = vdwg.mxu0
    %v155 = vadd.f32 %v107, %v150
    %v156 = vmul.f32 %v155, 0.5
    %v157 = vtanh.pop %v156
    %v158 = vmul.f32 %v157, 0.5
    %v159 = vadd.f32 %v158, 0.5
    %v160 = vtanh.pop %v155
    %v161 = vmul.f32 %v159, %v98
    %163 = vrot.lane.b32.xlu0 %v160, 32
    %v164 = vpop.permute.xlu0 %163
    %v166 = vmul.f32 %v159, %v164
    %168 = vrot.lane.b32.xlu0 %v166, 32
    %v169 = vpop.permute.xlu0 %168
    %v171 = vadd.f32 %v161, %v169
    %v172 = vtanh.pop %v171
    %174 = vrot.lane.b32.xlu0 %v172, 32
    %v175 = vpop.permute.xlu0 %174
    %v177 = vmul.f32 %v159, %v175
    %s178 = sld [smem:[#allocation3 + $0x2]]
    %s179 = scalar_lea.vmem [#allocation4], %s178
    %v180 = vld [vmem:[%s179] sm:$0x1]
    %v181 = vpack.c.bf16 %v177, %v177
    %183 = vrot.lane.b32.xlu0 %v181, 64
    %v184 = vpop.permute.xlu0 %183
    %v186 = vsel %vm38, %v184, 0
    %188 = vmatprep.subr.bf16.mxu0 0
    %189 = vmatpush1.bf16.msra.mxu0 %v33
    %190 = vmatprep.subr.bf16.mxu0 0
    %191 = vmatpush1.bf16.msra.mxu0 %v34
    %192 = vmatprep.subr.bf16.mxu0 0
    %193 = vmatpush1.bf16.msra.mxu0 0
    %194 = vmatprep.subr.bf16.mxu0 0
    %195 = vmatpush1.bf16.msra.mxu0 0
    %196 = vmatprep.subr.bf16.mxu0 0
    %197 = vmatpush1.bf16.msra.mxu0 0
    %198 = vmatprep.subr.bf16.mxu0 0
    %199 = vmatpush1.bf16.msra.mxu0 0
    %200 = vmatprep.subr.bf16.mxu0 0
    %201 = vmatpush1.bf16.msra.mxu0 0
    %202 = vmatprep.subr.bf16.mxu0 0
    %203 = vmatpush1.bf16.msra.mxu0 0
    %204 = vmatprep.subr.bf16.mxu0 0
    %205 = vmatpush1.bf16.msra.mxu0 0
    %206 = vmatprep.subr.bf16.mxu0 0
    %207 = vmatpush1.bf16.msra.mxu0 0
    %208 = vmatprep.subr.bf16.mxu0 0
    %209 = vmatpush1.bf16.msra.mxu0 0
    %210 = vmatprep.subr.bf16.mxu0 0
    %211 = vmatpush1.bf16.msra.mxu0 0
    %212 = vmatprep.subr.bf16.mxu0 0
    %213 = vmatpush1.bf16.msra.mxu0 0
    %214 = vmatprep.subr.bf16.mxu0 0
    %215 = vmatpush1.bf16.msra.mxu0 0
    %216 = vmatprep.subr.bf16.mxu0 0
    %217 = vmatpush1.bf16.msra.mxu0 0
    %218 = vmatprep.subr.bf16.mxu0 0
    %219 = vmatpush1.bf16.msra.mxu0 0
    %220 = vmatprep.mubr.bf16.mxu0 0
    %221 = vmatmul.mubr.bf16.gmra.mrb[0].mxu0 %v186
    %v222 = vpop.f32.mrb[0].mxu0
    %v223 = vadd.f32 0.0, %v222
    %v224 = vpop.f32.mrb[0].mxu0
    %v225 = vpop.f32.mrb[0].mxu0
    %v226 = vpop.f32.mrb[0].mxu0
    %227 = vdwg.mxu0
    %v228 = vadd.f32 %v180, %v223
    %v229 = vmul.f32 %v228, 0.5
    %v230 = vtanh.pop %v229
    %v231 = vmul.f32 %v230, 0.5
    %v232 = vadd.f32 %v231, 0.5
    %v233 = vtanh.pop %v228
    %v234 = vmul.f32 %v232, %v171
    %236 = vrot.lane.b32.xlu0 %v233, 32
    %v237 = vpop.permute.xlu0 %236
    %v239 = vmul.f32 %v232, %v237
    %241 = vrot.lane.b32.xlu0 %v239, 32
    %v242 = vpop.permute.xlu0 %241
    %v244 = vadd.f32 %v234, %v242
    %v245 = vtanh.pop %v244
    %247 = vrot.lane.b32.xlu0 %v245, 32
    %v248 = vpop.permute.xlu0 %247
    %v250 = vmul.f32 %v232, %v248
    %s251 = sld [smem:[#allocation3 + $0x3]]
    %s252 = scalar_lea.vmem [#allocation4], %s251
    %v253 = vld [vmem:[%s252] sm:$0x1]
    %v254 = vpack.c.bf16 %v250, %v250
    %256 = vrot.lane.b32.xlu0 %v254, 64
    %v257 = vpop.permute.xlu0 %256
    %v259 = vsel %vm38, %v257, 0
    %261 = vmatprep.subr.bf16.mxu0 0
    %262 = vmatpush1.bf16.msra.mxu0 %v33
    %263 = vmatprep.subr.bf16.mxu0 0
    %264 = vmatpush1.bf16.msra.mxu0 %v34
    %265 = vmatprep.subr.bf16.mxu0 0
    %266 = vmatpush1.bf16.msra.mxu0 0
    %267 = vmatprep.subr.bf16.mxu0 0
    %268 = vmatpush1.bf16.msra.mxu0 0
    %269 = vmatprep.subr.bf16.mxu0 0
    %270 = vmatpush1.bf16.msra.mxu0 0
    %271 = vmatprep.subr.bf16.mxu0 0
    %272 = vmatpush1.bf16.msra.mxu0 0
    %273 = vmatprep.subr.bf16.mxu0 0
    %274 = vmatpush1.bf16.msra.mxu0 0
    %275 = vmatprep.subr.bf16.mxu0 0
    %276 = vmatpush1.bf16.msra.mxu0 0
    %277 = vmatprep.subr.bf16.mxu0 0
    %278 = vmatpush1.bf16.msra.mxu0 0
    %279 = vmatprep.subr.bf16.mxu0 0
    %280 = vmatpush1.bf16.msra.mxu0 0
    %281 = vmatprep.subr.bf16.mxu0 0
    %282 = vmatpush1.bf16.msra.mxu0 0
    %283 = vmatprep.subr.bf16.mxu0 0
    %284 = vmatpush1.bf16.msra.mxu0 0
    %285 = vmatprep.subr.bf16.mxu0 0
    %286 = vmatpush1.bf16.msra.mxu0 0
    %287 = vmatprep.subr.bf16.mxu0 0
    %288 = vmatpush1.bf16.msra.mxu0 0
    %289 = vmatprep.subr.bf16.mxu0 0
    %290 = vmatpush1.bf16.msra.mxu0 0
    %291 = vmatprep.subr.bf16.mxu0 0
    %292 = vmatpush1.bf16.msra.mxu0 0
    %293 = vmatprep.mubr.bf16.mxu0 0
    %294 = vmatmul.mubr.bf16.gmra.mrb[0].mxu0 %v259
    %v295 = vpop.f32.mrb[0].mxu0
    %v296 = vadd.f32 0.0, %v295
    %v297 = vpop.f32.mrb[0].mxu0
    %v298 = vpop.f32.mrb[0].mxu0
    %v299 = vpop.f32.mrb[0].mxu0
    %300 = vdwg.mxu0
    %v301 = vadd.f32 %v253, %v296
    %v302 = vmul.f32 %v301, 0.5
    %v303 = vtanh.pop %v302
    %v304 = vmul.f32 %v303, 0.5
    %v305 = vadd.f32 %v304, 0.5
    %v306 = vtanh.pop %v301
    %v307 = vmul.f32 %v305, %v244
    %309 = vrot.lane.b32.xlu0 %v306, 32
    %v310 = vpop.permute.xlu0 %309
    %v312 = vmul.f32 %v305, %v310
    %314 = vrot.lane.b32.xlu0 %v312, 32
    %v315 = vpop.permute.xlu0 %314
    %v317 = vadd.f32 %v307, %v315
    %v318 = vtanh.pop %v317
    %320 = vrot.lane.b32.xlu0 %v318, 32
    %v321 = vpop.permute.xlu0 %320
    %v323 = vmul.f32 %v305, %v321
    %s324 = sld [smem:[#allocation3 + $0x4]]
    %s325 = scalar_lea.vmem [#allocation4], %s324
    %v326 = vld [vmem:[%s325] sm:$0x1]
    %v327 = vpack.c.bf16 %v323, %v323
    %329 = vrot.lane.b32.xlu0 %v327, 64
    %v330 = vpop.permute.xlu0 %329
    %v332 = vsel %vm38, %v330, 0
    %334 = vmatprep.subr.bf16.mxu0 0
    %335 = vmatpush1.bf16.msra.mxu0 %v33
    %336 = vmatprep.subr.bf16.mxu0 0
    %337 = vmatpush1.bf16.msra.mxu0 %v34
    %338 = vmatprep.subr.bf16.mxu0 0
    %339 = vmatpush1.bf16.msra.mxu0 0
    %340 = vmatprep.subr.bf16.mxu0 0
    %341 = vmatpush1.bf16.msra.mxu0 0
    %342 = vmatprep.subr.bf16.mxu0 0
    %343 = vmatpush1.bf16.msra.mxu0 0
    %344 = vmatprep.subr.bf16.mxu0 0
    %345 = vmatpush1.bf16.msra.mxu0 0
    %346 = vmatprep.subr.bf16.mxu0 0
    %347 = vmatpush1.bf16.msra.mxu0 0
    %348 = vmatprep.subr.bf16.mxu0 0
    %349 = vmatpush1.bf16.msra.mxu0 0
    %350 = vmatprep.subr.bf16.mxu0 0
    %351 = vmatpush1.bf16.msra.mxu0 0
    %352 = vmatprep.subr.bf16.mxu0 0
    %353 = vmatpush1.bf16.msra.mxu0 0
    %354 = vmatprep.subr.bf16.mxu0 0
    %355 = vmatpush1.bf16.msra.mxu0 0
    %356 = vmatprep.subr.bf16.mxu0 0
    %357 = vmatpush1.bf16.msra.mxu0 0
    %358 = vmatprep.subr.bf16.mxu0 0
    %359 = vmatpush1.bf16.msra.mxu0 0
    %360 = vmatprep.subr.bf16.mxu0 0
    %361 = vmatpush1.bf16.msra.mxu0 0
    %362 = vmatprep.subr.bf16.mxu0 0
    %363 = vmatpush1.bf16.msra.mxu0 0
    %364 = vmatprep.subr.bf16.mxu0 0
    %365 = vmatpush1.bf16.msra.mxu0 0
    %366 = vmatprep.mubr.bf16.mxu0 0
    %367 = vmatmul.mubr.bf16.gmra.mrb[0].mxu0 %v332
    %v368 = vpop.f32.mrb[0].mxu0
    %v369 = vadd.f32 0.0, %v368
    %v370 = vpop.f32.mrb[0].mxu0
    %v371 = vpop.f32.mrb[0].mxu0
    %v372 = vpop.f32.mrb[0].mxu0
    %373 = vdwg.mxu0
    %v374 = vadd.f32 %v326, %v369
    %v375 = vmul.f32 %v374, 0.5
    %v376 = vtanh.pop %v375
    %v377 = vmul.f32 %v376, 0.5
    %v378 = vadd.f32 %v377, 0.5
    %v379 = vtanh.pop %v374
    %v380 = vmul.f32 %v378, %v317
    %382 = vrot.lane.b32.xlu0 %v379, 32
    %v383 = vpop.permute.xlu0 %382
    %v385 = vmul.f32 %v378, %v383
    %387 = vrot.lane.b32.xlu0 %v385, 32
    %v388 = vpop.permute.xlu0 %387
    %v390 = vadd.f32 %v380, %v388
    %v391 = vtanh.pop %v390
    %393 = vrot.lane.b32.xlu0 %v391, 32
    %v394 = vpop.permute.xlu0 %393
    %v396 = vmul.f32 %v378, %v394
    %s397 = sld [smem:[#allocation3 + $0x5]]
    %s398 = scalar_lea.vmem [#allocation4], %s397
    %v399 = vld [vmem:[%s398] sm:$0x1]
    %v400 = vpack.c.bf16 %v396, %v396
    %402 = vrot.lane.b32.xlu0 %v400, 64
    %v403 = vpop.permute.xlu0 %402
    %v405 = vsel %vm38, %v403, 0
    %407 = vmatprep.subr.bf16.mxu0 0
    %408 = vmatpush1.bf16.msra.mxu0 %v33
    %409 = vmatprep.subr.bf16.mxu0 0
    %410 = vmatpush1.bf16.msra.mxu0 %v34
    %411 = vmatprep.subr.bf16.mxu0 0
    %412 = vmatpush1.bf16.msra.mxu0 0
    %413 = vmatprep.subr.bf16.mxu0 0
    %414 = vmatpush1.bf16.msra.mxu0 0
    %415 = vmatprep.subr.bf16.mxu0 0
    %416 = vmatpush1.bf16.msra.mxu0 0
    %417 = vmatprep.subr.bf16.mxu0 0
    %418 = vmatpush1.bf16.msra.mxu0 0
    %419 = vmatprep.subr.bf16.mxu0 0
    %420 = vmatpush1.bf16.msra.mxu0 0
    %421 = vmatprep.subr.bf16.mxu0 0
    %422 = vmatpush1.bf16.msra.mxu0 0
    %423 = vmatprep.subr.bf16.mxu0 0
    %424 = vmatpush1.bf16.msra.mxu0 0
    %425 = vmatprep.subr.bf16.mxu0 0
    %426 = vmatpush1.bf16.msra.mxu0 0
    %427 = vmatprep.subr.bf16.mxu0 0
    %428 = vmatpush1.bf16.msra.mxu0 0
    %429 = vmatprep.subr.bf16.mxu0 0
    %430 = vmatpush1.bf16.msra.mxu0 0
    %431 = vmatprep.subr.bf16.mxu0 0
    %432 = vmatpush1.bf16.msra.mxu0 0
    %433 = vmatprep.subr.bf16.mxu0 0
    %434 = vmatpush1.bf16.msra.mxu0 0
    %435 = vmatprep.subr.bf16.mxu0 0
    %436 = vmatpush1.bf16.msra.mxu0 0
    %437 = vmatprep.subr.bf16.mxu0 0
    %438 = vmatpush1.bf16.msra.mxu0 0
    %439 = vmatprep.mubr.bf16.mxu0 0
    %440 = vmatmul.mubr.bf16.gmra.mrb[0].mxu0 %v405
    %v441 = vpop.f32.mrb[0].mxu0
    %v442 = vadd.f32 0.0, %v441
    %v443 = vpop.f32.mrb[0].mxu0
    %v444 = vpop.f32.mrb[0].mxu0
    %v445 = vpop.f32.mrb[0].mxu0
    %446 = vdwg.mxu0
    %v447 = vadd.f32 %v399, %v442
    %v448 = vmul.f32 %v447, 0.5
    %v449 = vtanh.pop %v448
    %v450 = vmul.f32 %v449, 0.5
    %v451 = vadd.f32 %v450, 0.5
    %v452 = vtanh.pop %v447
    %v453 = vmul.f32 %v451, %v390
    %455 = vrot.lane.b32.xlu0 %v452, 32
    %v456 = vpop.permute.xlu0 %455
    %v458 = vmul.f32 %v451, %v456
    %460 = vrot.lane.b32.xlu0 %v458, 32
    %v461 = vpop.permute.xlu0 %460
    %v463 = vadd.f32 %v453, %v461
    %v464 = vtanh.pop %v463
    %466 = vrot.lane.b32.xlu0 %v464, 32
    %v467 = vpop.permute.xlu0 %466
    %v469 = vmul.f32 %v451, %v467
    %s470 = sld [smem:[#allocation3 + $0x6]]
    %s471 = scalar_lea.vmem [#allocation4], %s470
    %v472 = vld [vmem:[%s471] sm:$0x1]
    %v473 = vpack.c.bf16 %v469, %v469
    %475 = vrot.lane.b32.xlu0 %v473, 64
    %v476 = vpop.permute.xlu0 %475
    %v478 = vsel %vm38, %v476, 0
    %480 = vmatprep.subr.bf16.mxu0 0
    %481 = vmatpush1.bf16.msra.mxu0 %v33
    %482 = vmatprep.subr.bf16.mxu0 0
    %483 = vmatpush1.bf16.msra.mxu0 %v34
    %484 = vmatprep.subr.bf16.mxu0 0
    %485 = vmatpush1.bf16.msra.mxu0 0
    %486 = vmatprep.subr.bf16.mxu0 0
    %487 = vmatpush1.bf16.msra.mxu0 0
    %488 = vmatprep.subr.bf16.mxu0 0
    %489 = vmatpush1.bf16.msra.mxu0 0
    %490 = vmatprep.subr.bf16.mxu0 0
    %491 = vmatpush1.bf16.msra.mxu0 0
    %492 = vmatprep.subr.bf16.mxu0 0
    %493 = vmatpush1.bf16.msra.mxu0 0
    %494 = vmatprep.subr.bf16.mxu0 0
    %495 = vmatpush1.bf16.msra.mxu0 0
    %496 = vmatprep.subr.bf16.mxu0 0
    %497 = vmatpush1.bf16.msra.mxu0 0
    %498 = vmatprep.subr.bf16.mxu0 0
    %499 = vmatpush1.bf16.msra.mxu0 0
    %500 = vmatprep.subr.bf16.mxu0 0
    %501 = vmatpush1.bf16.msra.mxu0 0
    %502 = vmatprep.subr.bf16.mxu0 0
    %503 = vmatpush1.bf16.msra.mxu0 0
    %504 = vmatprep.subr.bf16.mxu0 0
    %505 = vmatpush1.bf16.msra.mxu0 0
    %506 = vmatprep.subr.bf16.mxu0 0
    %507 = vmatpush1.bf16.msra.mxu0 0
    %508 = vmatprep.subr.bf16.mxu0 0
    %509 = vmatpush1.bf16.msra.mxu0 0
    %510 = vmatprep.subr.bf16.mxu0 0
    %511 = vmatpush1.bf16.msra.mxu0 0
    %512 = vmatprep.mubr.bf16.mxu0 0
    %513 = vmatmul.mubr.bf16.gmra.mrb[0].mxu0 %v478
    %v514 = vpop.f32.mrb[0].mxu0
    %v515 = vadd.f32 0.0, %v514
    %v516 = vpop.f32.mrb[0].mxu0
    %v517 = vpop.f32.mrb[0].mxu0
    %v518 = vpop.f32.mrb[0].mxu0
    %519 = vdwg.mxu0
    %v520 = vadd.f32 %v472, %v515
    %v521 = vmul.f32 %v520, 0.5
    %v522 = vtanh.pop %v521
    %v523 = vmul.f32 %v522, 0.5
    %v524 = vadd.f32 %v523, 0.5
    %v525 = vtanh.pop %v520
    %v526 = vmul.f32 %v524, %v463
    %528 = vrot.lane.b32.xlu0 %v525, 32
    %v529 = vpop.permute.xlu0 %528
    %v531 = vmul.f32 %v524, %v529
    %533 = vrot.lane.b32.xlu0 %v531, 32
    %v534 = vpop.permute.xlu0 %533
    %v536 = vadd.f32 %v526, %v534
    %v537 = vtanh.pop %v536
    %539 = vrot.lane.b32.xlu0 %v537, 32
    %v540 = vpop.permute.xlu0 %539
    %v542 = vmul.f32 %v524, %v540
    %s543 = sld [smem:[#allocation3 + $0x7]]
    %s544 = scalar_lea.vmem [#allocation4], %s543
    %v545 = vld [vmem:[%s544] sm:$0x1]
    %v546 = vpack.c.bf16 %v542, %v542
    %548 = vrot.lane.b32.xlu0 %v546, 64
    %v549 = vpop.permute.xlu0 %548
    %v551 = vsel %vm38, %v549, 0
    %553 = vmatprep.subr.bf16.mxu0 0
    %554 = vmatpush1.bf16.msra.mxu0 %v33
    %555 = vmatprep.subr.bf16.mxu0 0
    %556 = vmatpush1.bf16.msra.mxu0 %v34
    %557 = vmatprep.subr.bf16.mxu0 0
    %558 = vmatpush1.bf16.msra.mxu0 0
    %559 = vmatprep.subr.bf16.mxu0 0
    %560 = vmatpush1.bf16.msra.mxu0 0
    %561 = vmatprep.subr.bf16.mxu0 0
    %562 = vmatpush1.bf16.msra.mxu0 0
    %563 = vmatprep.subr.bf16.mxu0 0
    %564 = vmatpush1.bf16.msra.mxu0 0
    %565 = vmatprep.subr.bf16.mxu0 0
    %566 = vmatpush1.bf16.msra.mxu0 0
    %567 = vmatprep.subr.bf16.mxu0 0
    %568 = vmatpush1.bf16.msra.mxu0 0
    %569 = vmatprep.subr.bf16.mxu0 0
    %570 = vmatpush1.bf16.msra.mxu0 0
    %571 = vmatprep.subr.bf16.mxu0 0
    %572 = vmatpush1.bf16.msra.mxu0 0
    %573 = vmatprep.subr.bf16.mxu0 0
    %574 = vmatpush1.bf16.msra.mxu0 0
    %575 = vmatprep.subr.bf16.mxu0 0
    %576 = vmatpush1.bf16.msra.mxu0 0
    %577 = vmatprep.subr.bf16.mxu0 0
    %578 = vmatpush1.bf16.msra.mxu0 0
    %579 = vmatprep.subr.bf16.mxu0 0
    %580 = vmatpush1.bf16.msra.mxu0 0
    %581 = vmatprep.subr.bf16.mxu0 0
    %582 = vmatpush1.bf16.msra.mxu0 0
    %583 = vmatprep.subr.bf16.mxu0 0
    %584 = vmatpush1.bf16.msra.mxu0 0
    %585 = vmatprep.mubr.bf16.mxu0 0
    %586 = vmatmul.mubr.bf16.gmra.mrb[0].mxu0 %v551
    %v587 = vpop.f32.mrb[0].mxu0
    %v588 = vadd.f32 0.0, %v587
    %v589 = vpop.f32.mrb[0].mxu0
    %v590 = vpop.f32.mrb[0].mxu0
    %v591 = vpop.f32.mrb[0].mxu0
    %592 = vdwg.mxu0
    %v593 = vadd.f32 %v545, %v588
    %v594 = vmul.f32 %v593, 0.5
    %v595 = vtanh.pop %v594
    %v596 = vmul.f32 %v595, 0.5
    %v597 = vadd.f32 %v596, 0.5
    %v598 = vtanh.pop %v593
    %v599 = vmul.f32 %v597, %v536
    %601 = vrot.lane.b32.xlu0 %v598, 32
    %v602 = vpop.permute.xlu0 %601
    %v604 = vmul.f32 %v597, %v602
    %606 = vrot.lane.b32.xlu0 %v604, 32
    %v607 = vpop.permute.xlu0 %606
    %v609 = vadd.f32 %v599, %v607
    %v610 = vtanh.pop %v609
    %612 = vrot.lane.b32.xlu0 %v610, 32
    %v613 = vpop.permute.xlu0 %612
    %v615 = vmul.f32 %v597, %v613
    %v616 = vld [vmem:[#allocation4 + $0x38] sm:$0xff]
    %v617 = vld [vmem:[#allocation4 + $0x40] sm:$0xff]
    %v618 = vld [vmem:[#allocation4 + $0x48] sm:$0xff]
    %v619 = vld [vmem:[#allocation4 + $0x50] sm:$0xff]
    %v620 = vld [vmem:[#allocation4 + $0x58] sm:$0x1]
    %622 = vrot.lane.b32.xlu0 %v615, 64
    %v623 = vpop.permute.xlu0 %622
    %v624 = vsel %vm38, %v623, 0
    %626 = vmatprep.subr.mxu0 0.0
    %627 = vmatpush1.msra.mxu0 %v616
    %628 = vmatprep.subr.mxu0 0.0
    %629 = vmatpush1.msra.mxu0 %v617
    %630 = vmatprep.subr.mxu0 0.0
    %631 = vmatpush1.msra.mxu0 %v618
    %632 = vmatprep.subr.mxu0 0.0
    %633 = vmatpush1.msra.mxu0 %v619
    %634 = vmatprep.subr.mxu0 0.0
    %635 = vmatpush1.msra.mxu0 0.0
    %636 = vmatprep.subr.mxu0 0.0
    %637 = vmatpush1.msra.mxu0 0.0
    %638 = vmatprep.subr.mxu0 0.0
    %639 = vmatpush1.msra.mxu0 0.0
    %640 = vmatprep.subr.mxu0 0.0
    %641 = vmatpush1.msra.mxu0 0.0
    %642 = vmatprep.subr.mxu0 0.0
    %643 = vmatpush1.msra.mxu0 0.0
    %644 = vmatprep.subr.mxu0 0.0
    %645 = vmatpush1.msra.mxu0 0.0
    %646 = vmatprep.subr.mxu0 0.0
    %647 = vmatpush1.msra.mxu0 0.0
    %648 = vmatprep.subr.mxu0 0.0
    %649 = vmatpush1.msra.mxu0 0.0
    %650 = vmatprep.subr.mxu0 0.0
    %651 = vmatpush1.msra.mxu0 0.0
    %652 = vmatprep.subr.mxu0 0.0
    %653 = vmatpush1.msra.mxu0 0.0
    %654 = vmatprep.subr.mxu0 0.0
    %655 = vmatpush1.msra.mxu0 0.0
    %656 = vmatprep.subr.mxu0 0.0
    %657 = vmatpush1.msra.mxu0 0.0
    %658 = vmatprep.subr.mxu0 0.0
    %659 = vmatpush1.msra.mxu0 0.0
    %660 = vmatprep.subr.mxu0 0.0
    %661 = vmatpush1.msra.mxu0 0.0
    %662 = vmatprep.subr.mxu0 0.0
    %663 = vmatpush1.msra.mxu0 0.0
    %664 = vmatprep.subr.mxu0 0.0
    %665 = vmatpush1.msra.mxu0 0.0
    %666 = vmatprep.subr.mxu0 0.0
    %667 = vmatpush1.msra.mxu0 0.0
    %668 = vmatprep.subr.mxu0 0.0
    %669 = vmatpush1.msra.mxu0 0.0
    %670 = vmatprep.subr.mxu0 0.0
    %671 = vmatpush1.msra.mxu0 0.0
    %672 = vmatprep.subr.mxu0 0.0
    %673 = vmatpush1.msra.mxu0 0.0
    %674 = vmatprep.subr.mxu0 0.0
    %675 = vmatpush1.msra.mxu0 0.0
    %676 = vmatprep.subr.mxu0 0.0
    %677 = vmatpush1.msra.mxu0 0.0
    %678 = vmatprep.subr.mxu0 0.0
    %679 = vmatpush1.msra.mxu0 0.0
    %680 = vmatprep.subr.mxu0 0.0
    %681 = vmatpush1.msra.mxu0 0.0
    %682 = vmatprep.subr.mxu0 0.0
    %683 = vmatpush1.msra.mxu0 0.0
    %684 = vmatprep.subr.mxu0 0.0
    %685 = vmatpush1.msra.mxu0 0.0
    %686 = vmatprep.subr.mxu0 0.0
    %687 = vmatpush1.msra.mxu0 0.0
    %688 = vmatprep.subr.mxu0 0.0
    %689 = vmatpush1.msra.mxu0 0.0
    %690 = vmatprep.mubr.f32.mxu0 0.0
    %691 = vmatmul.mubr.f32.gmra.mrb[0].mxu0 %v624
    %v692 = vpop.f32.mrb[0].mxu0
    %v693 = vadd.f32 %v620, %v692
    %v694 = vpop.f32.mrb[0].mxu0
    %695 = vdwg.mxu0
    %696 = vst [vmem:[#allocation7] sm:$0x1] %v693
    // Predicated region
    $region10: #{tpu_custom_call.1} parent=1 // pred_check
      _
    $region11: #{tpu_custom_call.1} parent=1 // pred_check_branch
      %698 = sbr.rel (0) target = $region13
    $region12: #{tpu_custom_call.1} parent=1 // pred_region
      %s700 = ssub.s32 16, 16
      %701 = vsyncadd [#allocation6], %s700
      %s703 = sshll.u32 [#allocation7], 4
      %s704 = int_to_ptr.vmem [resolvable:$true] %s703
      %706 = dma.vmem_to_hbm [thread:$0]  %s704, 16, %s2, [#allocation6]
    $region13: #{tpu_custom_call.1} parent=1 // pred_fallthru
      _
    // Predicated region
    $region14: #{tpu_custom_call.1} parent=1 // pred_check
      _
    $region15: #{tpu_custom_call.1} parent=1 // pred_check_branch
      %708 = sbr.rel (0) target = $region17
    $region16: #{tpu_custom_call.1} parent=1 // pred_region
      %709 = dma.done [#allocation6], 16
    $region17: #{tpu_custom_call.1} parent=1 // pred_fallthru
      _
    %710 = vsyncpa [#allocation5], 1
    %711 = vsyncpa [#allocation6], 1

</llo_original>
